<compile_context>
chip_gen: v7x
topology: tpu7x:2x2x1
jax: 0.10.0
libtpu: 0.0.40
codegen_flags: <defaults>
</compile_context>

<pallas_src>
import math

import numpy as np

import jax
import jax.numpy as jnp
from jax.experimental import pallas as pl
from jax.experimental.pallas import tpu as pltpu

_EPS = 1e-12  # F.normalize default eps


def _rbf_kernel(x_ref, sel_ref, bsel_ref, gsum_ref, o_ref):
    # x_ref:    (tm, pk)     packed scalar rows; col `pack` is 1.0, rest of pad 0
    # sel_ref:  (pk, lane)   scaled selector: rows g<pack hold s on group-g lanes,
    #                        row `pack` holds -s*centers (tiled), rest zero
    # bsel_ref: (pk, lane)   binary selector (group membership), rows >= pack zero
    # gsum_ref: (lane, pk)   transpose of bsel (segmented-sum matrix)
    # o_ref:    (tm, lane)   lane-dense output block
    xr = jnp.dot(x_ref[...], sel_ref[...],
                 preferred_element_type=jnp.float32)            # (tm, lane) = s*(x - c)
    ret = jnp.exp(-(xr * xr))                                   # (tm, lane), >= 0

    # Segmented L1 sum per original row (MXU), approx reciprocal + one Newton
    # step on the narrow result (EUP + a few narrow VALU ops), fold the *2 of
    # the normalization, broadcast back to lanes via the binary selector.
    row_sum = jnp.dot(ret, gsum_ref[...],
                      preferred_element_type=jnp.float32)       # (tm, pk)
    s = jnp.maximum(row_sum, _EPS)
    r0 = pl.reciprocal(s, approx=True)
    inv2 = r0 * (4.0 - (s + s) * r0)                            # = 2 * refined(1/s)
    inv2_b = jnp.dot(inv2, bsel_ref[...],
                     preferred_element_type=jnp.float32)        # (tm, lane)

    o_ref[...] = (ret * inv2_b - 1.0).astype(o_ref.dtype)


def rbf_forward(x, start, end, n_center, *, tm=None, out_dtype=jnp.float32):
    """x: (..., 1) float -> (..., n_center) `out_dtype` (default float32)."""
    assert x.ndim >= 2 and x.shape[-1] == 1

    width = (end - start) / n_center
    scale = 1.0 / (width * math.sqrt(2.0))  # exp(-0.5((x-c)/w)^2) == exp(-(scale*(x-c))^2)
    centers = np.linspace(start, end, n_center, dtype=np.float32)

    # Pack rows into the 128-lane axis when n_center divides 128 (lane-dense output).
    if n_center <= 128 and 128 % n_center == 0:
        pack = 128 // n_center
    else:
        pack = 1  # fallback: correct, but lane-sparse masked stores (slow path)
    lane = pack * n_center
    pk = max(8, pl.cdiv(pack + 1, 8) * 8)  # packed-column axis, +1 for the ones column
    ones_col = pack

    lead = x.shape[:-1]
    m = math.prod(lead)
    xf = x.reshape(m).astype(jnp.float32)

    # Pack `pack` original rows per packed row; pad columns to pk with the
    # constant-1 column (carries -scale*centers through the matmul) plus zeros.
    mp = pl.cdiv(m, pack)
    if mp * pack != m:
        xf = jnp.pad(xf, (0, mp * pack - m))
    xp = xf.reshape(mp, pack)
    cols = [xp, jnp.ones((mp, 1), jnp.float32)]
    if pk - pack - 1 > 0:
        cols.append(jnp.zeros((mp, pk - pack - 1), jnp.float32))
    xp = jnp.concatenate(cols, axis=1)

    # Row tile: large (amortize ~0.35us/step overhead), sized per generation so
    # the double-buffered working set fits the default scoped-VMEM limits.
    if tm is None:
        try:
            kind = jax.devices()[0].device_kind.lower()
        except Exception:  # pragma: no cover - defensive
            kind = ""
        tm = 8192 if ("v6" in kind or "7" in kind) else 4096
    # Keep >=2 grid steps (v7x has 2 TensorCores; "parallel" shards the grid),
    # aim for >=8 steps, but never shrink tiles below ~1024 rows when avoidable.
    tm_cap = max(pl.cdiv(mp, 8), min(pl.cdiv(mp, 2), 1024))
    tm = min(tm, tm_cap)
    tm = max(8, pl.cdiv(tm, 8) * 8)

    mp_pad = pl.cdiv(mp, tm) * tm
    if mp_pad != mp:
        xp = jnp.pad(xp, ((0, mp_pad - mp), (0, 0)))

    # Constant matrices (built once on host; tiny resident VMEM blocks).
    group = np.arange(lane) // n_center                                   # (lane,)
    bsel = (np.arange(pk)[:, None] == group[None, :]).astype(np.float32)  # (pk, lane)
    gsum = np.ascontiguousarray(bsel.T)                                   # (lane, pk)
    sel = scale * bsel
    sel[ones_col, :] = -scale * np.tile(centers, pack)                    # folded centers
    sel_j = jnp.asarray(sel)
    bsel_j = jnp.asarray(bsel)
    gsum_j = jnp.asarray(gsum)

    out = pl.pallas_call(
        _rbf_kernel,
        out_shape=jax.ShapeDtypeStruct((mp_pad, lane), out_dtype),
        grid_spec=pltpu.PrefetchScalarGridSpec(
            num_scalar_prefetch=0,
            grid=(mp_pad // tm,),
            in_specs=[
                pl.BlockSpec((tm, pk), lambda i: (i, 0)),
                pl.BlockSpec((pk, lane), lambda i: (0, 0)),
                pl.BlockSpec((pk, lane), lambda i: (0, 0)),
                pl.BlockSpec((lane, pk), lambda i: (0, 0)),
            ],
            out_specs=pl.BlockSpec((tm, lane), lambda i: (i, 0)),
        ),
        compiler_params=pltpu.CompilerParams(
            dimension_semantics=("parallel",)),
    )(xp, sel_j, bsel_j, gsum_j)

    # Unpack: (mp, pack*n_center) -> (mp*pack, n_center) -> original leading dims.
    # Slices are only emitted when padding actually happened, so the common
    # divisible case is a pure (free) reshape of the lane-dense buffer.
    if mp_pad != mp:
        out = out[:mp]
    out = out.reshape(mp * pack, n_center)
    if mp * pack != m:
        out = out[:m]
    return out.reshape(*lead, n_center)


def _reference(x, start, end, n_center):
    centers = jnp.linspace(start, end, n_center, dtype=jnp.float32)
    width = (end - start) / n_center
    o = (x.astype(jnp.float32) - centers) / width
    r = jnp.exp(-0.5 * o * o)
    return r / jnp.maximum(jnp.sum(jnp.abs(r), axis=-1, keepdims=True), 1e-12) * 2.0 - 1.0


if __name__ == "__main__":
    # Deterministic "parameters": start / end / n_center define centers & width.
    start, end, n_center = 0.0, 2.0, 32

    key = jax.random.PRNGKey(0)
    # batch=2, seq=8 pairwise-distance-like scalars in (..., 1)
    x = jax.random.uniform(key, (2, 8, 1), dtype=jnp.float32, minval=0.0, maxval=2.0)

    y = rbf_forward(x, start, end, n_center)
    jax.block_until_ready(y)

    ref = _reference(x, start, end, n_center)
    assert y.shape == (2, 8, n_center)
    assert float(jnp.max(jnp.abs(y - ref))) < 2e-3

    # Second check: row count not a multiple of the 4-row lane packing and not a
    # multiple of the row tile, exercising the pack/pad/unpack path.
    key2 = jax.random.PRNGKey(1)
    x2 = jax.random.uniform(key2, (4, 300, 1), dtype=jnp.float32, minval=0.0, maxval=2.0)
    y2 = rbf_forward(x2, start, end, n_center)
    jax.block_until_ready(y2)
    ref2 = _reference(x2, start, end, n_center)
    assert y2.shape == (4, 300, n_center)
    assert float(jnp.max(jnp.abs(y2 - ref2))) < 2e-3

    print("KERNEL_OK")
</pallas_src>

<mosaic_0001>
module attributes {stable_mosaic.version = 11 : i64} {
  func.func @_rbf_kernel(%arg0: i32, %arg1: memref<8x8xf32, #tpu.memory_space<vmem>>, %arg2: memref<8x128xf32, #tpu.memory_space<vmem>>, %arg3: memref<8x128xf32, #tpu.memory_space<vmem>>, %arg4: memref<128x8xf32, #tpu.memory_space<vmem>>, %arg5: memref<8x128xf32, #tpu.memory_space<vmem>>) attributes {dimension_semantics = [#tpu.dimension_semantics<parallel>], iteration_bounds = array<i64: 1>, scalar_prefetch = 0 : i64, scratch_operands = 0 : i64, tpu.core_type = #tpu.core_type<tc>, window_params = [{transform_indices = @transform_0, window_bounds = array<i64: 8, 8>}, {pipeline_mode = #tpu.pipeline_mode<synchronous>, transform_indices = @transform_1, window_bounds = array<i64: 8, 128>}, {pipeline_mode = #tpu.pipeline_mode<synchronous>, transform_indices = @transform_2, window_bounds = array<i64: 8, 128>}, {pipeline_mode = #tpu.pipeline_mode<synchronous>, transform_indices = @transform_3, window_bounds = array<i64: 128, 8>}, {transform_indices = @transform_4, window_bounds = array<i64: 8, 128>}]} {
    %c0 = arith.constant 0 : index
    %c0_0 = arith.constant 0 : index
    %0 = vector.load %arg1[%c0, %c0_0] : memref<8x8xf32, #tpu.memory_space<vmem>>, vector<8x8xf32>
    %c0_1 = arith.constant 0 : index
    %c0_2 = arith.constant 0 : index
    %1 = vector.load %arg2[%c0_1, %c0_2] : memref<8x128xf32, #tpu.memory_space<vmem>>, vector<8x128xf32>
    %cst = arith.constant dense<0.000000e+00> : vector<8x128xf32>
    %2 = tpu.matmul %0, %1, %cst {dimension_numbers = #tpu.dot_dimension_numbers<[1], [0], [0], [1], [0, 0, 1, 1], [], []>} : vector<8x8xf32>, vector<8x128xf32>, vector<8x128xf32> -> vector<8x128xf32>
    %3 = arith.mulf %2, %2 : vector<8x128xf32>
    %cst_3 = arith.constant 0.000000e+00 : f32
    %4 = vector.broadcast %cst_3 : f32 to vector<8x128xf32>
    %5 = arith.subf %4, %3 : vector<8x128xf32>
    %6 = math.exp %5 : vector<8x128xf32>
    %c0_4 = arith.constant 0 : index
    %c0_5 = arith.constant 0 : index
    %7 = vector.load %arg4[%c0_4, %c0_5] : memref<128x8xf32, #tpu.memory_space<vmem>>, vector<128x8xf32>
    %cst_6 = arith.constant dense<0.000000e+00> : vector<8x8xf32>
    %8 = tpu.matmul %6, %7, %cst_6 {dimension_numbers = #tpu.dot_dimension_numbers<[1], [0], [0], [1], [0, 0, 1, 1], [], []>} : vector<8x128xf32>, vector<128x8xf32>, vector<8x8xf32> -> vector<8x8xf32>
    %cst_7 = arith.constant 9.99999996E-13 : f32
    %9 = vector.broadcast %cst_7 : f32 to vector<8x8xf32>
    %10 = arith.maximumf %8, %9 : vector<8x8xf32>
    %11 = tpu.reciprocal %10 {approx = true} : vector<8x8xf32> -> vector<8x8xf32>
    %12 = arith.addf %10, %10 : vector<8x8xf32>
    %13 = arith.mulf %12, %11 : vector<8x8xf32>
    %cst_8 = arith.constant 4.000000e+00 : f32
    %14 = vector.broadcast %cst_8 : f32 to vector<8x8xf32>
    %15 = arith.subf %14, %13 : vector<8x8xf32>
    %16 = arith.mulf %11, %15 : vector<8x8xf32>
    %c0_9 = arith.constant 0 : index
    %c0_10 = arith.constant 0 : index
    %17 = vector.load %arg3[%c0_9, %c0_10] : memref<8x128xf32, #tpu.memory_space<vmem>>, vector<8x128xf32>
    %cst_11 = arith.constant dense<0.000000e+00> : vector<8x128xf32>
    %18 = tpu.matmul %16, %17, %cst_11 {dimension_numbers = #tpu.dot_dimension_numbers<[1], [0], [0], [1], [0, 0, 1, 1], [], []>} : vector<8x8xf32>, vector<8x128xf32>, vector<8x128xf32> -> vector<8x128xf32>
    %19 = arith.mulf %6, %18 : vector<8x128xf32>
    %cst_12 = arith.constant 1.000000e+00 : f32
    %20 = vector.broadcast %cst_12 : f32 to vector<8x128xf32>
    %21 = arith.subf %19, %20 : vector<8x128xf32>
    %c0_13 = arith.constant 0 : index
    %c0_14 = arith.constant 0 : index
    %22 = vector.load %arg5[%c0_13, %c0_14] : memref<8x128xf32, #tpu.memory_space<vmem>>, vector<8x128xf32>
    tpu.vector_store %arg5[%c0_13, %c0_14], %21 {strides = array<i32>} : memref<8x128xf32, #tpu.memory_space<vmem>>, vector<8x128xf32>,
    return
  }
  func.func @transform_0(%arg0: i32) -> (i32, i32) {
    %c0_i32 = arith.constant 0 : i32
    %c0_i32_0 = arith.constant 0 : i32
    return %arg0, %c0_i32 : i32, i32
  }
  func.func @transform_1(%arg0: i32) -> (i32, i32) {
    %c0_i32 = arith.constant 0 : i32
    %c0_i32_0 = arith.constant 0 : i32
    %c0_i32_1 = arith.constant 0 : i32
    return %c0_i32, %c0_i32_0 : i32, i32
  }
  func.func @transform_2(%arg0: i32) -> (i32, i32) {
    %c0_i32 = arith.constant 0 : i32
    %c0_i32_0 = arith.constant 0 : i32
    %c0_i32_1 = arith.constant 0 : i32
    return %c0_i32, %c0_i32_0 : i32, i32
  }
  func.func @transform_3(%arg0: i32) -> (i32, i32) {
    %c0_i32 = arith.constant 0 : i32
    %c0_i32_0 = arith.constant 0 : i32
    %c0_i32_1 = arith.constant 0 : i32
    return %c0_i32, %c0_i32_0 : i32, i32
  }
  func.func @transform_4(%arg0: i32) -> (i32, i32) {
    %c0_i32 = arith.constant 0 : i32
    %c0_i32_0 = arith.constant 0 : i32
    return %arg0, %c0_i32 : i32, i32
  }
}

</mosaic_0001>

<llo_original>
// kernel: tpu_custom_call.1
$region0: #{tpu_custom_call.1}
  #allocation0 [shape = 'u32[]', space=smem, size = 0x4, offset = 0x4, fixed_abs, tag = 'smem constant byte address 0x4 - core index']
  #allocation1 [shape = 'u32[144,128]{1,0:T(1,128)}', space=vmem, size = 0x12000, scoped, tag = 'internal scratch']
  %s0 = inlined_call_operand.vmem [shape: f32[8,8], index: 0, kind: input, shape index: {}]
  %s1 = inlined_call_operand.vmem [shape: f32[8,128], index: 1, kind: input, shape index: {}]
  %s2 = inlined_call_operand.vmem [shape: f32[8,128], index: 2, kind: input, shape index: {}]
  %s3 = inlined_call_operand.vmem [shape: f32[128,8], index: 3, kind: input, shape index: {}]
  %s4 = inlined_call_operand.hbm [shape: f32[8,128], index: 4, kind: output, shape index: {}]
  %s5 = sld [smem:[#allocation0]]
  $region26: #{tpu_custom_call.1} parent=0
    _
  %s7 = ssub.s32 1, %s5
  %s8 = scalar_select 0, %s7, %s5
  $region1: #{tpu_custom_call.1} parent=0
    #allocation2 [shape = 'u8[4096]{0}', space=vmem, size = 0x1000, scoped, tag = 'output window, operand 0, single buffered']
    #allocation3 [shape = 's32[1]{0}', space=sflag, size = 0x4, scoped, tag = 'scoped memory for tpu_custom_call.1']
    %9 = vsyncpa [#allocation3], 0
    // Predicated region
    $region2: #{tpu_custom_call.1} parent=1 // pred_check
      _
    $region3: #{tpu_custom_call.1} parent=1 // pred_check_branch
      %11 = sbr.rel (0) target = $region5
    $region4: #{tpu_custom_call.1} parent=1 // pred_region
      _
    $region5: #{tpu_custom_call.1} parent=1 // pred_fallthru
      _
    // Predicated region
    $region6: #{tpu_custom_call.1} parent=1 // pred_check
      _
    $region7: #{tpu_custom_call.1} parent=1 // pred_check_branch
      %13 = sbr.rel (0) target = $region9
    $region8: #{tpu_custom_call.1} parent=1 // pred_region
      _
    $region9: #{tpu_custom_call.1} parent=1 // pred_fallthru
      _
    // Predicated region
    $region10: #{tpu_custom_call.1} parent=1 // pred_check
      _
    $region11: #{tpu_custom_call.1} parent=1 // pred_check_branch
      %15 = sbr.rel (0) target = $region13
    $region12: #{tpu_custom_call.1} parent=1 // pred_region
      _
    $region13: #{tpu_custom_call.1} parent=1 // pred_fallthru
      _
    // Predicated region
    $region14: #{tpu_custom_call.1} parent=1 // pred_check
      _
    $region15: #{tpu_custom_call.1} parent=1 // pred_check_branch
      %17 = sbr.rel (0) target = $region17
    $region16: #{tpu_custom_call.1} parent=1 // pred_region
      _
    $region17: #{tpu_custom_call.1} parent=1 // pred_fallthru
      _
    %v18 = vld [vmem:[%s0] sm:$0xff]
    %v19 = vld [vmem:[%s1] sm:$0xff]
    %vm20 = vcmask 64512
    %v22 = vsel %vm20, %v18, 0
    %24 = vmatprep.subr.mxu0 0.0
    %25 = vmatpush1.msra.mxu0 %v19
    %26 = vmatprep.subr.mxu0 0.0
    %27 = vmatpush1.msra.mxu0 0.0
    %28 = vmatprep.subr.mxu0 0.0
    %29 = vmatpush1.msra.mxu0 0.0
    %30 = vmatprep.subr.mxu0 0.0
    %31 = vmatpush1.msra.mxu0 0.0
    %32 = vmatprep.subr.mxu0 0.0
    %33 = vmatpush1.msra.mxu0 0.0
    %34 = vmatprep.subr.mxu0 0.0
    %35 = vmatpush1.msra.mxu0 0.0
    %36 = vmatprep.subr.mxu0 0.0
    %37 = vmatpush1.msra.mxu0 0.0
    %38 = vmatprep.subr.mxu0 0.0
    %39 = vmatpush1.msra.mxu0 0.0
    %40 = vmatprep.subr.mxu0 0.0
    %41 = vmatpush1.msra.mxu0 0.0
    %42 = vmatprep.subr.mxu0 0.0
    %43 = vmatpush1.msra.mxu0 0.0
    %44 = vmatprep.subr.mxu0 0.0
    %45 = vmatpush1.msra.mxu0 0.0
    %46 = vmatprep.subr.mxu0 0.0
    %47 = vmatpush1.msra.mxu0 0.0
    %48 = vmatprep.subr.mxu0 0.0
    %49 = vmatpush1.msra.mxu0 0.0
    %50 = vmatprep.subr.mxu0 0.0
    %51 = vmatpush1.msra.mxu0 0.0
    %52 = vmatprep.subr.mxu0 0.0
    %53 = vmatpush1.msra.mxu0 0.0
    %54 = vmatprep.subr.mxu0 0.0
    %55 = vmatpush1.msra.mxu0 0.0
    %56 = vmatprep.subr.mxu0 0.0
    %57 = vmatpush1.msra.mxu0 0.0
    %58 = vmatprep.subr.mxu0 0.0
    %59 = vmatpush1.msra.mxu0 0.0
    %60 = vmatprep.subr.mxu0 0.0
    %61 = vmatpush1.msra.mxu0 0.0
    %62 = vmatprep.subr.mxu0 0.0
    %63 = vmatpush1.msra.mxu0 0.0
    %64 = vmatprep.subr.mxu0 0.0
    %65 = vmatpush1.msra.mxu0 0.0
    %66 = vmatprep.subr.mxu0 0.0
    %67 = vmatpush1.msra.mxu0 0.0
    %68 = vmatprep.subr.mxu0 0.0
    %69 = vmatpush1.msra.mxu0 0.0
    %70 = vmatprep.subr.mxu0 0.0
    %71 = vmatpush1.msra.mxu0 0.0
    %72 = vmatprep.subr.mxu0 0.0
    %73 = vmatpush1.msra.mxu0 0.0
    %74 = vmatprep.subr.mxu0 0.0
    %75 = vmatpush1.msra.mxu0 0.0
    %76 = vmatprep.subr.mxu0 0.0
    %77 = vmatpush1.msra.mxu0 0.0
    %78 = vmatprep.subr.mxu0 0.0
    %79 = vmatpush1.msra.mxu0 0.0
    %80 = vmatprep.subr.mxu0 0.0
    %81 = vmatpush1.msra.mxu0 0.0
    %82 = vmatprep.subr.mxu0 0.0
    %83 = vmatpush1.msra.mxu0 0.0
    %84 = vmatprep.subr.mxu0 0.0
    %85 = vmatpush1.msra.mxu0 0.0
    %86 = vmatprep.subr.mxu0 0.0
    %87 = vmatpush1.msra.mxu0 0.0
    %88 = vmatprep.mubr.f32.mxu0 0.0
    %89 = vmatmul.mubr.f32.gmra.mrb[0].mxu0 %v22
    %v90 = vpop.f32.mrb[0].mxu0
    %v91 = vadd.f32 0.0, %v90
    %v92 = vpop.f32.mrb[0].mxu0
    %93 = vdwg.mxu0
    %v94 = vmul.f32 %v91, %v91
    %v95 = vsub.f32 0.0, %v94
    %v96 = vmul.f32 %v95, 1.442695
    %v97 = vpow.pop %v96
    %v98 = vld [vmem:[%s3] sm:$0xff]
    %v99 = vld [vmem:[%s3 + $0x8] sm:$0xff]
    %v100 = vld [vmem:[%s3 + $0x10] sm:$0xff]
    %v101 = vld [vmem:[%s3 + $0x18] sm:$0xff]
    %v102 = vld [vmem:[%s3 + $0x20] sm:$0xff]
    %v103 = vld [vmem:[%s3 + $0x28] sm:$0xff]
    %v104 = vld [vmem:[%s3 + $0x30] sm:$0xff]
    %v105 = vld [vmem:[%s3 + $0x38] sm:$0xff]
    %v106 = vld [vmem:[%s3 + $0x40] sm:$0xff]
    %v107 = vld [vmem:[%s3 + $0x48] sm:$0xff]
    %v108 = vld [vmem:[%s3 + $0x50] sm:$0xff]
    %v109 = vld [vmem:[%s3 + $0x58] sm:$0xff]
    %v110 = vld [vmem:[%s3 + $0x60] sm:$0xff]
    %v111 = vld [vmem:[%s3 + $0x68] sm:$0xff]
    %v112 = vld [vmem:[%s3 + $0x70] sm:$0xff]
    %v113 = vld [vmem:[%s3 + $0x78] sm:$0xff]
    %114 = vmatprep.subr.mxu0 0.0
    %115 = vmatpush1.msra.mxu0 %v98
    %116 = vmatprep.subr.mxu0 0.0
    %117 = vmatpush1.msra.mxu0 %v99
    %118 = vmatprep.subr.mxu0 0.0
    %119 = vmatpush1.msra.mxu0 %v100
    %120 = vmatprep.subr.mxu0 0.0
    %121 = vmatpush1.msra.mxu0 %v101
    %122 = vmatprep.subr.mxu0 0.0
    %123 = vmatpush1.msra.mxu0 %v102
    %124 = vmatprep.subr.mxu0 0.0
    %125 = vmatpush1.msra.mxu0 %v103
    %126 = vmatprep.subr.mxu0 0.0
    %127 = vmatpush1.msra.mxu0 %v104
    %128 = vmatprep.subr.mxu0 0.0
    %129 = vmatpush1.msra.mxu0 %v105
    %130 = vmatprep.subr.mxu0 0.0
    %131 = vmatpush1.msra.mxu0 %v106
    %132 = vmatprep.subr.mxu0 0.0
    %133 = vmatpush1.msra.mxu0 %v107
    %134 = vmatprep.subr.mxu0 0.0
    %135 = vmatpush1.msra.mxu0 %v108
    %136 = vmatprep.subr.mxu0 0.0
    %137 = vmatpush1.msra.mxu0 %v109
    %138 = vmatprep.subr.mxu0 0.0
    %139 = vmatpush1.msra.mxu0 %v110
    %140 = vmatprep.subr.mxu0 0.0
    %141 = vmatpush1.msra.mxu0 %v111
    %142 = vmatprep.subr.mxu0 0.0
    %143 = vmatpush1.msra.mxu0 %v112
    %144 = vmatprep.subr.mxu0 0.0
    %145 = vmatpush1.msra.mxu0 %v113
    %146 = vmatprep.subr.mxu0 0.0
    %147 = vmatpush1.msra.mxu0 0.0
    %148 = vmatprep.subr.mxu0 0.0
    %149 = vmatpush1.msra.mxu0 0.0
    %150 = vmatprep.subr.mxu0 0.0
    %151 = vmatpush1.msra.mxu0 0.0
    %152 = vmatprep.subr.mxu0 0.0
    %153 = vmatpush1.msra.mxu0 0.0
    %154 = vmatprep.subr.mxu0 0.0
    %155 = vmatpush1.msra.mxu0 0.0
    %156 = vmatprep.subr.mxu0 0.0
    %157 = vmatpush1.msra.mxu0 0.0
    %158 = vmatprep.subr.mxu0 0.0
    %159 = vmatpush1.msra.mxu0 0.0
    %160 = vmatprep.subr.mxu0 0.0
    %161 = vmatpush1.msra.mxu0 0.0
    %162 = vmatprep.subr.mxu0 0.0
    %163 = vmatpush1.msra.mxu0 0.0
    %164 = vmatprep.subr.mxu0 0.0
    %165 = vmatpush1.msra.mxu0 0.0
    %166 = vmatprep.subr.mxu0 0.0
    %167 = vmatpush1.msra.mxu0 0.0
    %168 = vmatprep.subr.mxu0 0.0
    %169 = vmatpush1.msra.mxu0 0.0
    %170 = vmatprep.subr.mxu0 0.0
    %171 = vmatpush1.msra.mxu0 0.0
    %172 = vmatprep.subr.mxu0 0.0
    %173 = vmatpush1.msra.mxu0 0.0
    %174 = vmatprep.subr.mxu0 0.0
    %175 = vmatpush1.msra.mxu0 0.0
    %176 = vmatprep.subr.mxu0 0.0
    %177 = vmatpush1.msra.mxu0 0.0
    %178 = vmatprep.mubr.f32.mxu0 0.0
    %179 = vmatmul.mubr.f32.gmra.mrb[0].mxu0 %v97
    %v180 = vpop.f32.mrb[0].mxu0
    %v181 = vadd.f32 0.0, %v180
    %v182 = vpop.f32.mrb[0].mxu0
    %183 = vdwg.mxu0
    %v184 = vmax.f32 %v181, 1e-12
    %v185 = vrcp.pop %v184
    %v186 = vadd.f32 %v184, %v184
    %v187 = vmul.f32 %v186, %v185
    %v188 = vsub.f32 4.0, %v187
    %v189 = vmul.f32 %v185, %v188
    %v190 = vld [vmem:[%s2] sm:$0xff]
    %v192 = vsel %vm20, %v189, 0
    %194 = vmatprep.subr.mxu0 0.0
    %195 = vmatpush1.msra.mxu0 %v190
    %196 = vmatprep.subr.mxu0 0.0
    %197 = vmatpush1.msra.mxu0 0.0
    %198 = vmatprep.subr.mxu0 0.0
    %199 = vmatpush1.msra.mxu0 0.0
    %200 = vmatprep.subr.mxu0 0.0
    %201 = vmatpush1.msra.mxu0 0.0
    %202 = vmatprep.subr.mxu0 0.0
    %203 = vmatpush1.msra.mxu0 0.0
    %204 = vmatprep.subr.mxu0 0.0
    %205 = vmatpush1.msra.mxu0 0.0
    %206 = vmatprep.subr.mxu0 0.0
    %207 = vmatpush1.msra.mxu0 0.0
    %208 = vmatprep.subr.mxu0 0.0
    %209 = vmatpush1.msra.mxu0 0.0
    %210 = vmatprep.subr.mxu0 0.0
    %211 = vmatpush1.msra.mxu0 0.0
    %212 = vmatprep.subr.mxu0 0.0
    %213 = vmatpush1.msra.mxu0 0.0
    %214 = vmatprep.subr.mxu0 0.0
    %215 = vmatpush1.msra.mxu0 0.0
    %216 = vmatprep.subr.mxu0 0.0
    %217 = vmatpush1.msra.mxu0 0.0
    %218 = vmatprep.subr.mxu0 0.0
    %219 = vmatpush1.msra.mxu0 0.0
    %220 = vmatprep.subr.mxu0 0.0
    %221 = vmatpush1.msra.mxu0 0.0
    %222 = vmatprep.subr.mxu0 0.0
    %223 = vmatpush1.msra.mxu0 0.0
    %224 = vmatprep.subr.mxu0 0.0
    %225 = vmatpush1.msra.mxu0 0.0
    %226 = vmatprep.subr.mxu0 0.0
    %227 = vmatpush1.msra.mxu0 0.0
    %228 = vmatprep.subr.mxu0 0.0
    %229 = vmatpush1.msra.mxu0 0.0
    %230 = vmatprep.subr.mxu0 0.0
    %231 = vmatpush1.msra.mxu0 0.0
    %232 = vmatprep.subr.mxu0 0.0
    %233 = vmatpush1.msra.mxu0 0.0
    %234 = vmatprep.subr.mxu0 0.0
    %235 = vmatpush1.msra.mxu0 0.0
    %236 = vmatprep.subr.mxu0 0.0
    %237 = vmatpush1.msra.mxu0 0.0
    %238 = vmatprep.subr.mxu0 0.0
    %239 = vmatpush1.msra.mxu0 0.0
    %240 = vmatprep.subr.mxu0 0.0
    %241 = vmatpush1.msra.mxu0 0.0
    %242 = vmatprep.subr.mxu0 0.0
    %243 = vmatpush1.msra.mxu0 0.0
    %244 = vmatprep.subr.mxu0 0.0
    %245 = vmatpush1.msra.mxu0 0.0
    %246 = vmatprep.subr.mxu0 0.0
    %247 = vmatpush1.msra.mxu0 0.0
    %248 = vmatprep.subr.mxu0 0.0
    %249 = vmatpush1.msra.mxu0 0.0
    %250 = vmatprep.subr.mxu0 0.0
    %251 = vmatpush1.msra.mxu0 0.0
    %252 = vmatprep.subr.mxu0 0.0
    %253 = vmatpush1.msra.mxu0 0.0
    %254 = vmatprep.subr.mxu0 0.0
    %255 = vmatpush1.msra.mxu0 0.0
    %256 = vmatprep.subr.mxu0 0.0
    %257 = vmatpush1.msra.mxu0 0.0
    %258 = vmatprep.mubr.f32.mxu0 0.0
    %259 = vmatmul.mubr.f32.gmra.mrb[0].mxu0 %v192
    %v260 = vpop.f32.mrb[0].mxu0
    %v261 = vadd.f32 0.0, %v260
    %v262 = vpop.f32.mrb[0].mxu0
    %263 = vdwg.mxu0
    %v264 = vmul.f32 %v97, %v261
    %v265 = vsub.f32 %v264, 1.0
    %266 = vst [vmem:[#allocation2] sm:$0xff] %v265
    // Predicated region
    $region18: #{tpu_custom_call.1} parent=1 // pred_check
      _
    $region19: #{tpu_custom_call.1} parent=1 // pred_check_branch
      %268 = sbr.rel (0) target = $region21
    $region20: #{tpu_custom_call.1} parent=1 // pred_region
      %s270 = ssub.s32 128, 128
      %271 = vsyncadd [#allocation3], %s270
      %s273 = sshll.u32 [#allocation2], 4
      %s274 = int_to_ptr.vmem [resolvable:$true] %s273
      %276 = dma.vmem_to_hbm [thread:$0]  %s274, 128, %s4, [#allocation3]
    $region21: #{tpu_custom_call.1} parent=1 // pred_fallthru
      _
    // Predicated region
    $region22: #{tpu_custom_call.1} parent=1 // pred_check
      _
    $region23: #{tpu_custom_call.1} parent=1 // pred_check_branch
      %278 = sbr.rel (0) target = $region25
    $region24: #{tpu_custom_call.1} parent=1 // pred_region
      %279 = dma.done [#allocation3], 128
    $region25: #{tpu_custom_call.1} parent=1 // pred_fallthru
      _
    %280 = vsyncpa [#allocation3], 1

</llo_original>
